<compile_context>
chip_gen: v6e
topology: v6e:2x2x1
jax: 0.10.0
libtpu: 0.0.40
codegen_flags: <defaults>
</compile_context>

<pallas_src>
import functools

import jax
import jax.numpy as jnp
from jax.experimental import pallas as pl
from jax.experimental.pallas import tpu as pltpu


def _ca_kernel(x_ref, w1_ref, b1_ref, w2_ref, out_ref, *, H, W):
    # x_ref/out_ref: (C, H*W) lane-dense blocks (batch dim squeezed).
    # w1_ref: (Cr, C) with BN scale folded; b1_ref: (Cr, 1) with BN bias folded;
    # w2_ref: (C, Cr).  Weight blocks are whole-array and stay VMEM-resident.
    xf = x_ref[...]                                    # (C, H*W)
    C = xf.shape[0]

    # --- pooling from the flat layout (exact; image row h == lanes [h*W,(h+1)*W)) --
    row0 = xf[:, 0:W]
    xw = row0                                          # running max over H -> (C, W)
    row_sums = [jnp.sum(row0, axis=1, keepdims=True)]
    for hh in range(1, H):
        row = xf[:, hh * W:(hh + 1) * W]               # (C, W) == x[:, hh, :]
        xw = jnp.maximum(xw, row)
        row_sums.append(jnp.sum(row, axis=1, keepdims=True))
    xh = jnp.concatenate(row_sums, axis=1) * (1.0 / W)     # mean over W -> (C, H)

    y = jnp.concatenate([xh, xw], axis=1)              # (C, H+W)

    # --- fc1 (1x1 conv == channel matmul) with folded BatchNorm + h_swish ----
    z = jnp.dot(w1_ref[...], y,
                preferred_element_type=jnp.float32) + b1_ref[...]    # (Cr, H+W)
    z = z * (jnp.clip(z + 3.0, 0.0, 6.0) * (1.0 / 6.0))              # h_swish

    # --- fc2 + sigmoid, FUSED over both branches in a single matmul ----------
    g = jax.nn.sigmoid(
        jnp.dot(w2_ref[...], z, preferred_element_type=jnp.float32))  # (C, H+W)
    gh = g[:, :H]                                      # (C, H) gate along H
    gw = g[:, H:]                                      # (C, W) gate along W

    # --- lane-dense outer product: out[c, h*W + w] = gh[c, h] * gw[c, w] ------
    gw_tiled = jnp.concatenate([gw] * H, axis=1)       # (C, H*W), pure data movement
    gh_rep = jnp.concatenate(
        [jnp.broadcast_to(gh[:, hh:hh + 1], (C, W)) for hh in range(H)],
        axis=1)                                        # (C, H*W)
    out_ref[...] = gh_rep * gw_tiled                   # one full-lane VPU mul, unmasked store


def coordinate_attention(x, w1, bn_gamma, bn_beta, bn_mean, bn_var, w2,
                         eps=1e-5):
    """x: (N, C, H, W) float32.  Returns (N, C, H, W)."""
    n, c, h, w = x.shape
    cr = w1.shape[0]
    hw = h * w

    # Fold eval-mode BatchNorm into fc1:  BN(W1 y) = (s*W1) y + (beta - s*mean)
    s = bn_gamma / jnp.sqrt(bn_var + eps)              # (Cr,)
    w1_eff = w1 * s[:, None]                           # (Cr, C)
    b1 = (bn_beta - bn_mean * s).reshape(cr, 1)        # (Cr, 1)

    # Free, contiguous reshape to a lane-dense layout (last dim H*W).
    x_flat = x.reshape(n, c, hw)

    kernel = functools.partial(_ca_kernel, H=h, W=w)

    # VMEM budget: in + out blocks double-buffered + resident weights + slack.
    io_bytes = c * hw * 4
    weight_bytes = 4 * (cr * c + cr + c * cr)
    vmem_needed = 4 * io_bytes + 2 * weight_bytes + (2 << 20)
    vmem_limit = int(min(max(vmem_needed, 16 << 20), 48 << 20))  # v7x-safe cap

    out_flat = pl.pallas_call(
        kernel,
        out_shape=jax.ShapeDtypeStruct((n, c, hw), jnp.float32),
        grid_spec=pltpu.PrefetchScalarGridSpec(
            num_scalar_prefetch=0,
            grid=(n,),
            in_specs=[
                pl.BlockSpec((None, c, hw), lambda b: (b, 0, 0)),
                pl.BlockSpec((cr, c), lambda b: (0, 0)),
                pl.BlockSpec((cr, 1), lambda b: (0, 0)),
                pl.BlockSpec((c, cr), lambda b: (0, 0)),
            ],
            out_specs=pl.BlockSpec((None, c, hw), lambda b: (b, 0, 0)),
        ),
        compiler_params=pltpu.CompilerParams(
            dimension_semantics=("parallel",),
            vmem_limit_bytes=vmem_limit),
    )(x_flat, w1_eff, b1, w2)

    return out_flat.reshape(n, c, h, w)


def _reference(x, w1, bn_gamma, bn_beta, bn_mean, bn_var, w2, eps=1e-5):
    """Pure-JAX mirror of the PyTorch forward (eval-mode BatchNorm)."""
    n, c, h, w = x.shape
    xh = jnp.mean(x, axis=3, keepdims=True)                 # (n,c,h,1)
    xw = jnp.max(x, axis=2, keepdims=True)                  # (n,c,1,w)
    xw = jnp.transpose(xw, (0, 1, 3, 2))                    # (n,c,w,1)
    y = jnp.concatenate([xh, xw], axis=2)                   # (n,c,h+w,1)
    z = jnp.einsum('oc,nchw->nohw', w1, y)
    z = ((z - bn_mean[None, :, None, None])
         / jnp.sqrt(bn_var[None, :, None, None] + eps)
         * bn_gamma[None, :, None, None] + bn_beta[None, :, None, None])
    z = z * jnp.clip(z + 3.0, 0.0, 6.0) / 6.0
    ah, aw = z[:, :, :h], z[:, :, h:]
    gh = jax.nn.sigmoid(jnp.einsum('oc,nchw->nohw', w2, ah))              # (n,c,h,1)
    gw = jax.nn.sigmoid(
        jnp.einsum('oc,nchw->nohw', w2, jnp.transpose(aw, (0, 1, 3, 2))))  # (n,c,1,w)
    return gh * gw


if __name__ == "__main__":
    N, C, H, W = 2, 16, 16, 16
    RATIO = 8
    CR = C // RATIO

    key = jax.random.PRNGKey(0)
    kx, k1, k2, kg, kb, km, kv = jax.random.split(key, 7)

    x = jax.random.normal(kx, (N, C, H, W), dtype=jnp.float32)

    # Deterministic synthetic parameters (shapes match the PyTorch module).
    w1 = jax.random.normal(k1, (CR, C), dtype=jnp.float32) * 0.2   # Conv2d(C, C/r, 1, bias=False)
    w2 = jax.random.normal(k2, (C, CR), dtype=jnp.float32) * 0.2   # Conv2d(C/r, C, 1, bias=False)
    bn_gamma = 1.0 + 0.1 * jax.random.normal(kg, (CR,), dtype=jnp.float32)
    bn_beta = 0.1 * jax.random.normal(kb, (CR,), dtype=jnp.float32)
    bn_mean = 0.1 * jax.random.normal(km, (CR,), dtype=jnp.float32)
    bn_var = jnp.abs(jax.random.normal(kv, (CR,), dtype=jnp.float32)) + 0.5

    out = coordinate_attention(x, w1, bn_gamma, bn_beta, bn_mean, bn_var, w2)
    out = jax.block_until_ready(out)

    ref = _reference(x, w1, bn_gamma, bn_beta, bn_mean, bn_var, w2)
    assert out.shape == (N, C, H, W)
    assert jnp.allclose(out, ref, atol=1e-5, rtol=1e-5), "mismatch vs reference"

    print("KERNEL_OK")
</pallas_src>

<mosaic_0001>
module attributes {stable_mosaic.version = 11 : i64} {
  func.func @_ca_kernel(%arg0: i32, %arg1: memref<1x16x256xf32, #tpu.memory_space<vmem>>, %arg2: memref<2x16xf32, #tpu.memory_space<vmem>>, %arg3: memref<2x1xf32, #tpu.memory_space<vmem>>, %arg4: memref<16x2xf32, #tpu.memory_space<vmem>>, %arg5: memref<1x16x256xf32, #tpu.memory_space<vmem>>) attributes {dimension_semantics = [#tpu.dimension_semantics<parallel>], iteration_bounds = array<i64: 2>, scalar_prefetch = 0 : i64, scratch_operands = 0 : i64, tpu.core_type = #tpu.core_type<tc>, window_params = [{transform_indices = @transform_0, window_bounds = array<i64: 1, 16, 256>}, {pipeline_mode = #tpu.pipeline_mode<synchronous>, transform_indices = @transform_1, window_bounds = array<i64: 2, 16>}, {pipeline_mode = #tpu.pipeline_mode<synchronous>, transform_indices = @transform_2, window_bounds = array<i64: 2, 1>}, {pipeline_mode = #tpu.pipeline_mode<synchronous>, transform_indices = @transform_3, window_bounds = array<i64: 16, 2>}, {transform_indices = @transform_4, window_bounds = array<i64: 1, 16, 256>}]} {
    %c0 = arith.constant 0 : index
    %c0_0 = arith.constant 0 : index
    %c0_1 = arith.constant 0 : index
    %0 = vector.load %arg1[%c0, %c0_0, %c0_1] : memref<1x16x256xf32, #tpu.memory_space<vmem>>, vector<1x16x256xf32>
    %1 = vector.shape_cast %0 : vector<1x16x256xf32> to vector<16x256xf32>
    %2 = vector.extract_strided_slice %1 {offsets = [0, 0], sizes = [16, 16], strides = [1, 1]} : vector<16x256xf32> to vector<16x16xf32>
    %cst = arith.constant dense<0.000000e+00> : vector<16xf32>
    %3 = vector.multi_reduction <add>, %2, %cst [1] : vector<16x16xf32> to vector<16xf32>
    %4 = vector.shape_cast %3 : vector<16xf32> to vector<16x1xf32>
    %5 = vector.extract_strided_slice %1 {offsets = [0, 16], sizes = [16, 16], strides = [1, 1]} : vector<16x256xf32> to vector<16x16xf32>
    %6 = arith.maximumf %2, %5 : vector<16x16xf32>
    %cst_2 = arith.constant dense<0.000000e+00> : vector<16xf32>
    %7 = vector.multi_reduction <add>, %5, %cst_2 [1] : vector<16x16xf32> to vector<16xf32>
    %8 = vector.shape_cast %7 : vector<16xf32> to vector<16x1xf32>
    %9 = vector.extract_strided_slice %1 {offsets = [0, 32], sizes = [16, 16], strides = [1, 1]} : vector<16x256xf32> to vector<16x16xf32>
    %10 = arith.maximumf %6, %9 : vector<16x16xf32>
    %cst_3 = arith.constant dense<0.000000e+00> : vector<16xf32>
    %11 = vector.multi_reduction <add>, %9, %cst_3 [1] : vector<16x16xf32> to vector<16xf32>
    %12 = vector.shape_cast %11 : vector<16xf32> to vector<16x1xf32>
    %13 = vector.extract_strided_slice %1 {offsets = [0, 48], sizes = [16, 16], strides = [1, 1]} : vector<16x256xf32> to vector<16x16xf32>
    %14 = arith.maximumf %10, %13 : vector<16x16xf32>
    %cst_4 = arith.constant dense<0.000000e+00> : vector<16xf32>
    %15 = vector.multi_reduction <add>, %13, %cst_4 [1] : vector<16x16xf32> to vector<16xf32>
    %16 = vector.shape_cast %15 : vector<16xf32> to vector<16x1xf32>
    %17 = vector.extract_strided_slice %1 {offsets = [0, 64], sizes = [16, 16], strides = [1, 1]} : vector<16x256xf32> to vector<16x16xf32>
    %18 = arith.maximumf %14, %17 : vector<16x16xf32>
    %cst_5 = arith.constant dense<0.000000e+00> : vector<16xf32>
    %19 = vector.multi_reduction <add>, %17, %cst_5 [1] : vector<16x16xf32> to vector<16xf32>
    %20 = vector.shape_cast %19 : vector<16xf32> to vector<16x1xf32>
    %21 = vector.extract_strided_slice %1 {offsets = [0, 80], sizes = [16, 16], strides = [1, 1]} : vector<16x256xf32> to vector<16x16xf32>
    %22 = arith.maximumf %18, %21 : vector<16x16xf32>
    %cst_6 = arith.constant dense<0.000000e+00> : vector<16xf32>
    %23 = vector.multi_reduction <add>, %21, %cst_6 [1] : vector<16x16xf32> to vector<16xf32>
    %24 = vector.shape_cast %23 : vector<16xf32> to vector<16x1xf32>
    %25 = vector.extract_strided_slice %1 {offsets = [0, 96], sizes = [16, 16], strides = [1, 1]} : vector<16x256xf32> to vector<16x16xf32>
    %26 = arith.maximumf %22, %25 : vector<16x16xf32>
    %cst_7 = arith.constant dense<0.000000e+00> : vector<16xf32>
    %27 = vector.multi_reduction <add>, %25, %cst_7 [1] : vector<16x16xf32> to vector<16xf32>
    %28 = vector.shape_cast %27 : vector<16xf32> to vector<16x1xf32>
    %29 = vector.extract_strided_slice %1 {offsets = [0, 112], sizes = [16, 16], strides = [1, 1]} : vector<16x256xf32> to vector<16x16xf32>
    %30 = arith.maximumf %26, %29 : vector<16x16xf32>
    %cst_8 = arith.constant dense<0.000000e+00> : vector<16xf32>
    %31 = vector.multi_reduction <add>, %29, %cst_8 [1] : vector<16x16xf32> to vector<16xf32>
    %32 = vector.shape_cast %31 : vector<16xf32> to vector<16x1xf32>
    %33 = vector.extract_strided_slice %1 {offsets = [0, 128], sizes = [16, 16], strides = [1, 1]} : vector<16x256xf32> to vector<16x16xf32>
    %34 = arith.maximumf %30, %33 : vector<16x16xf32>
    %cst_9 = arith.constant dense<0.000000e+00> : vector<16xf32>
    %35 = vector.multi_reduction <add>, %33, %cst_9 [1] : vector<16x16xf32> to vector<16xf32>
    %36 = vector.shape_cast %35 : vector<16xf32> to vector<16x1xf32>
    %37 = vector.extract_strided_slice %1 {offsets = [0, 144], sizes = [16, 16], strides = [1, 1]} : vector<16x256xf32> to vector<16x16xf32>
    %38 = arith.maximumf %34, %37 : vector<16x16xf32>
    %cst_10 = arith.constant dense<0.000000e+00> : vector<16xf32>
    %39 = vector.multi_reduction <add>, %37, %cst_10 [1] : vector<16x16xf32> to vector<16xf32>
    %40 = vector.shape_cast %39 : vector<16xf32> to vector<16x1xf32>
    %41 = vector.extract_strided_slice %1 {offsets = [0, 160], sizes = [16, 16], strides = [1, 1]} : vector<16x256xf32> to vector<16x16xf32>
    %42 = arith.maximumf %38, %41 : vector<16x16xf32>
    %cst_11 = arith.constant dense<0.000000e+00> : vector<16xf32>
    %43 = vector.multi_reduction <add>, %41, %cst_11 [1] : vector<16x16xf32> to vector<16xf32>
    %44 = vector.shape_cast %43 : vector<16xf32> to vector<16x1xf32>
    %45 = vector.extract_strided_slice %1 {offsets = [0, 176], sizes = [16, 16], strides = [1, 1]} : vector<16x256xf32> to vector<16x16xf32>
    %46 = arith.maximumf %42, %45 : vector<16x16xf32>
    %cst_12 = arith.constant dense<0.000000e+00> : vector<16xf32>
    %47 = vector.multi_reduction <add>, %45, %cst_12 [1] : vector<16x16xf32> to vector<16xf32>
    %48 = vector.shape_cast %47 : vector<16xf32> to vector<16x1xf32>
    %49 = vector.extract_strided_slice %1 {offsets = [0, 192], sizes = [16, 16], strides = [1, 1]} : vector<16x256xf32> to vector<16x16xf32>
    %50 = arith.maximumf %46, %49 : vector<16x16xf32>
    %cst_13 = arith.constant dense<0.000000e+00> : vector<16xf32>
    %51 = vector.multi_reduction <add>, %49, %cst_13 [1] : vector<16x16xf32> to vector<16xf32>
    %52 = vector.shape_cast %51 : vector<16xf32> to vector<16x1xf32>
    %53 = vector.extract_strided_slice %1 {offsets = [0, 208], sizes = [16, 16], strides = [1, 1]} : vector<16x256xf32> to vector<16x16xf32>
    %54 = arith.maximumf %50, %53 : vector<16x16xf32>
    %cst_14 = arith.constant dense<0.000000e+00> : vector<16xf32>
    %55 = vector.multi_reduction <add>, %53, %cst_14 [1] : vector<16x16xf32> to vector<16xf32>
    %56 = vector.shape_cast %55 : vector<16xf32> to vector<16x1xf32>
    %57 = vector.extract_strided_slice %1 {offsets = [0, 224], sizes = [16, 16], strides = [1, 1]} : vector<16x256xf32> to vector<16x16xf32>
    %58 = arith.maximumf %54, %57 : vector<16x16xf32>
    %cst_15 = arith.constant dense<0.000000e+00> : vector<16xf32>
    %59 = vector.multi_reduction <add>, %57, %cst_15 [1] : vector<16x16xf32> to vector<16xf32>
    %60 = vector.shape_cast %59 : vector<16xf32> to vector<16x1xf32>
    %61 = vector.extract_strided_slice %1 {offsets = [0, 240], sizes = [16, 16], strides = [1, 1]} : vector<16x256xf32> to vector<16x16xf32>
    %62 = arith.maximumf %58, %61 : vector<16x16xf32>
    %cst_16 = arith.constant dense<0.000000e+00> : vector<16xf32>
    %63 = vector.multi_reduction <add>, %61, %cst_16 [1] : vector<16x16xf32> to vector<16xf32>
    %64 = vector.shape_cast %63 : vector<16xf32> to vector<16x1xf32>
    %65 = tpu.concatenate %4, %8, %12, %16, %20, %24, %28, %32, %36, %40, %44, %48, %52, %56, %60, %64 in 1 : vector<16x1xf32>, vector<16x1xf32>, vector<16x1xf32>, vector<16x1xf32>, vector<16x1xf32>, vector<16x1xf32>, vector<16x1xf32>, vector<16x1xf32>, vector<16x1xf32>, vector<16x1xf32>, vector<16x1xf32>, vector<16x1xf32>, vector<16x1xf32>, vector<16x1xf32>, vector<16x1xf32>, vector<16x1xf32> -> vector<16x16xf32>
    %cst_17 = arith.constant 6.250000e-02 : f32
    %66 = vector.broadcast %cst_17 : f32 to vector<16x16xf32>
    %67 = arith.mulf %65, %66 : vector<16x16xf32>
    %68 = tpu.concatenate %67, %62 in 1 : vector<16x16xf32>, vector<16x16xf32> -> vector<16x32xf32>
    %c0_18 = arith.constant 0 : index
    %c0_19 = arith.constant 0 : index
    %69 = vector.load %arg2[%c0_18, %c0_19] : memref<2x16xf32, #tpu.memory_space<vmem>>, vector<2x16xf32>
    %cst_20 = arith.constant dense<0.000000e+00> : vector<2x32xf32>
    %70 = tpu.matmul %69, %68, %cst_20 {dimension_numbers = #tpu.dot_dimension_numbers<[1], [0], [0], [1], [0, 0, 1, 1], [], []>} : vector<2x16xf32>, vector<16x32xf32>, vector<2x32xf32> -> vector<2x32xf32>
    %c0_21 = arith.constant 0 : index
    %c0_22 = arith.constant 0 : index
    %71 = vector.load %arg3[%c0_21, %c0_22] : memref<2x1xf32, #tpu.memory_space<vmem>>, vector<2x1xf32>
    %72 = vector.broadcast %71 : vector<2x1xf32> to vector<2x32xf32>
    %73 = arith.addf %70, %72 : vector<2x32xf32>
    %cst_23 = arith.constant 3.000000e+00 : f32
    %74 = vector.broadcast %cst_23 : f32 to vector<2x32xf32>
    %75 = arith.addf %73, %74 : vector<2x32xf32>
    %cst_24 = arith.constant 0.000000e+00 : f32
    %cst_25 = arith.constant 6.000000e+00 : f32
    %76 = vector.broadcast %cst_24 : f32 to vector<2x32xf32>
    %77 = arith.maximumf %76, %75 : vector<2x32xf32>
    %78 = vector.broadcast %cst_25 : f32 to vector<2x32xf32>
    %79 = arith.minimumf %78, %77 : vector<2x32xf32>
    %cst_26 = arith.constant 0.166666672 : f32
    %80 = vector.broadcast %cst_26 : f32 to vector<2x32xf32>
    %81 = arith.mulf %79, %80 : vector<2x32xf32>
    %82 = arith.mulf %73, %81 : vector<2x32xf32>
    %c0_27 = arith.constant 0 : index
    %c0_28 = arith.constant 0 : index
    %83 = vector.load %arg4[%c0_27, %c0_28] : memref<16x2xf32, #tpu.memory_space<vmem>>, vector<16x2xf32>
    %cst_29 = arith.constant dense<0.000000e+00> : vector<16x32xf32>
    %84 = tpu.matmul %83, %82, %cst_29 {dimension_numbers = #tpu.dot_dimension_numbers<[1], [0], [0], [1], [0, 0, 1, 1], [], []>} : vector<16x2xf32>, vector<2x32xf32>, vector<16x32xf32> -> vector<16x32xf32>
    %85 = arith.negf %84 : vector<16x32xf32>
    %86 = math.exp %85 : vector<16x32xf32>
    %cst_30 = arith.constant 1.000000e+00 : f32
    %87 = vector.broadcast %cst_30 : f32 to vector<16x32xf32>
    %88 = arith.addf %87, %86 : vector<16x32xf32>
    %89 = arith.divf %87, %88 : vector<16x32xf32>
    %90 = vector.extract_strided_slice %89 {offsets = [0, 0], sizes = [16, 16], strides = [1, 1]} : vector<16x32xf32> to vector<16x16xf32>
    %91 = vector.extract_strided_slice %89 {offsets = [0, 16], sizes = [16, 16], strides = [1, 1]} : vector<16x32xf32> to vector<16x16xf32>
    %92 = tpu.concatenate %91, %91, %91, %91, %91, %91, %91, %91, %91, %91, %91, %91, %91, %91, %91, %91 in 1 : vector<16x16xf32>, vector<16x16xf32>, vector<16x16xf32>, vector<16x16xf32>, vector<16x16xf32>, vector<16x16xf32>, vector<16x16xf32>, vector<16x16xf32>, vector<16x16xf32>, vector<16x16xf32>, vector<16x16xf32>, vector<16x16xf32>, vector<16x16xf32>, vector<16x16xf32>, vector<16x16xf32>, vector<16x16xf32> -> vector<16x256xf32>
    %93 = vector.extract_strided_slice %90 {offsets = [0, 0], sizes = [16, 1], strides = [1, 1]} : vector<16x16xf32> to vector<16x1xf32>
    %94 = vector.shape_cast %93 : vector<16x1xf32> to vector<16x1xf32>
    %95 = vector.broadcast %94 : vector<16x1xf32> to vector<16x16xf32>
    %96 = vector.extract_strided_slice %90 {offsets = [0, 1], sizes = [16, 1], strides = [1, 1]} : vector<16x16xf32> to vector<16x1xf32>
    %97 = vector.shape_cast %96 : vector<16x1xf32> to vector<16x1xf32>
    %98 = vector.broadcast %97 : vector<16x1xf32> to vector<16x16xf32>
    %99 = vector.extract_strided_slice %90 {offsets = [0, 2], sizes = [16, 1], strides = [1, 1]} : vector<16x16xf32> to vector<16x1xf32>
    %100 = vector.shape_cast %99 : vector<16x1xf32> to vector<16x1xf32>
    %101 = vector.broadcast %100 : vector<16x1xf32> to vector<16x16xf32>
    %102 = vector.extract_strided_slice %90 {offsets = [0, 3], sizes = [16, 1], strides = [1, 1]} : vector<16x16xf32> to vector<16x1xf32>
    %103 = vector.shape_cast %102 : vector<16x1xf32> to vector<16x1xf32>
    %104 = vector.broadcast %103 : vector<16x1xf32> to vector<16x16xf32>
    %105 = vector.extract_strided_slice %90 {offsets = [0, 4], sizes = [16, 1], strides = [1, 1]} : vector<16x16xf32> to vector<16x1xf32>
    %106 = vector.shape_cast %105 : vector<16x1xf32> to vector<16x1xf32>
    %107 = vector.broadcast %106 : vector<16x1xf32> to vector<16x16xf32>
    %108 = vector.extract_strided_slice %90 {offsets = [0, 5], sizes = [16, 1], strides = [1, 1]} : vector<16x16xf32> to vector<16x1xf32>
    %109 = vector.shape_cast %108 : vector<16x1xf32> to vector<16x1xf32>
    %110 = vector.broadcast %109 : vector<16x1xf32> to vector<16x16xf32>
    %111 = vector.extract_strided_slice %90 {offsets = [0, 6], sizes = [16, 1], strides = [1, 1]} : vector<16x16xf32> to vector<16x1xf32>
    %112 = vector.shape_cast %111 : vector<16x1xf32> to vector<16x1xf32>
    %113 = vector.broadcast %112 : vector<16x1xf32> to vector<16x16xf32>
    %114 = vector.extract_strided_slice %90 {offsets = [0, 7], sizes = [16, 1], strides = [1, 1]} : vector<16x16xf32> to vector<16x1xf32>
    %115 = vector.shape_cast %114 : vector<16x1xf32> to vector<16x1xf32>
    %116 = vector.broadcast %115 : vector<16x1xf32> to vector<16x16xf32>
    %117 = vector.extract_strided_slice %90 {offsets = [0, 8], sizes = [16, 1], strides = [1, 1]} : vector<16x16xf32> to vector<16x1xf32>
    %118 = vector.shape_cast %117 : vector<16x1xf32> to vector<16x1xf32>
    %119 = vector.broadcast %118 : vector<16x1xf32> to vector<16x16xf32>
    %120 = vector.extract_strided_slice %90 {offsets = [0, 9], sizes = [16, 1], strides = [1, 1]} : vector<16x16xf32> to vector<16x1xf32>
    %121 = vector.shape_cast %120 : vector<16x1xf32> to vector<16x1xf32>
    %122 = vector.broadcast %121 : vector<16x1xf32> to vector<16x16xf32>
    %123 = vector.extract_strided_slice %90 {offsets = [0, 10], sizes = [16, 1], strides = [1, 1]} : vector<16x16xf32> to vector<16x1xf32>
    %124 = vector.shape_cast %123 : vector<16x1xf32> to vector<16x1xf32>
    %125 = vector.broadcast %124 : vector<16x1xf32> to vector<16x16xf32>
    %126 = vector.extract_strided_slice %90 {offsets = [0, 11], sizes = [16, 1], strides = [1, 1]} : vector<16x16xf32> to vector<16x1xf32>
    %127 = vector.shape_cast %126 : vector<16x1xf32> to vector<16x1xf32>
    %128 = vector.broadcast %127 : vector<16x1xf32> to vector<16x16xf32>
    %129 = vector.extract_strided_slice %90 {offsets = [0, 12], sizes = [16, 1], strides = [1, 1]} : vector<16x16xf32> to vector<16x1xf32>
    %130 = vector.shape_cast %129 : vector<16x1xf32> to vector<16x1xf32>
    %131 = vector.broadcast %130 : vector<16x1xf32> to vector<16x16xf32>
    %132 = vector.extract_strided_slice %90 {offsets = [0, 13], sizes = [16, 1], strides = [1, 1]} : vector<16x16xf32> to vector<16x1xf32>
    %133 = vector.shape_cast %132 : vector<16x1xf32> to vector<16x1xf32>
    %134 = vector.broadcast %133 : vector<16x1xf32> to vector<16x16xf32>
    %135 = vector.extract_strided_slice %90 {offsets = [0, 14], sizes = [16, 1], strides = [1, 1]} : vector<16x16xf32> to vector<16x1xf32>
    %136 = vector.shape_cast %135 : vector<16x1xf32> to vector<16x1xf32>
    %137 = vector.broadcast %136 : vector<16x1xf32> to vector<16x16xf32>
    %138 = vector.extract_strided_slice %90 {offsets = [0, 15], sizes = [16, 1], strides = [1, 1]} : vector<16x16xf32> to vector<16x1xf32>
    %139 = vector.shape_cast %138 : vector<16x1xf32> to vector<16x1xf32>
    %140 = vector.broadcast %139 : vector<16x1xf32> to vector<16x16xf32>
    %141 = tpu.concatenate %95, %98, %101, %104, %107, %110, %113, %116, %119, %122, %125, %128, %131, %134, %137, %140 in 1 : vector<16x16xf32>, vector<16x16xf32>, vector<16x16xf32>, vector<16x16xf32>, vector<16x16xf32>, vector<16x16xf32>, vector<16x16xf32>, vector<16x16xf32>, vector<16x16xf32>, vector<16x16xf32>, vector<16x16xf32>, vector<16x16xf32>, vector<16x16xf32>, vector<16x16xf32>, vector<16x16xf32>, vector<16x16xf32> -> vector<16x256xf32>
    %142 = arith.mulf %141, %92 : vector<16x256xf32>
    %c0_31 = arith.constant 0 : index
    %c0_32 = arith.constant 0 : index
    %c0_33 = arith.constant 0 : index
    %143 = vector.load %arg5[%c0_31, %c0_32, %c0_33] : memref<1x16x256xf32, #tpu.memory_space<vmem>>, vector<1x16x256xf32>
    %144 = vector.shape_cast %143 : vector<1x16x256xf32> to vector<16x256xf32>
    %145 = vector.shape_cast %142 : vector<16x256xf32> to vector<1x16x256xf32>
    tpu.vector_store %arg5[%c0_31, %c0_32, %c0_33], %145 {strides = array<i32>} : memref<1x16x256xf32, #tpu.memory_space<vmem>>, vector<1x16x256xf32>,
    return
  }
  func.func @transform_0(%arg0: i32) -> (i32, i32, i32) {
    %c0_i32 = arith.constant 0 : i32
    %c0_i32_0 = arith.constant 0 : i32
    %c0_i32_1 = arith.constant 0 : i32
    return %arg0, %c0_i32, %c0_i32_0 : i32, i32, i32
  }
  func.func @transform_1(%arg0: i32) -> (i32, i32) {
    %c0_i32 = arith.constant 0 : i32
    %c0_i32_0 = arith.constant 0 : i32
    %c0_i32_1 = arith.constant 0 : i32
    return %c0_i32, %c0_i32_0 : i32, i32
  }
  func.func @transform_2(%arg0: i32) -> (i32, i32) {
    %c0_i32 = arith.constant 0 : i32
    %c0_i32_0 = arith.constant 0 : i32
    %c0_i32_1 = arith.constant 0 : i32
    return %c0_i32, %c0_i32_0 : i32, i32
  }
  func.func @transform_3(%arg0: i32) -> (i32, i32) {
    %c0_i32 = arith.constant 0 : i32
    %c0_i32_0 = arith.constant 0 : i32
    %c0_i32_1 = arith.constant 0 : i32
    return %c0_i32, %c0_i32_0 : i32, i32
  }
  func.func @transform_4(%arg0: i32) -> (i32, i32, i32) {
    %c0_i32 = arith.constant 0 : i32
    %c0_i32_0 = arith.constant 0 : i32
    %c0_i32_1 = arith.constant 0 : i32
    return %arg0, %c0_i32, %c0_i32_0 : i32, i32, i32
  }
}

</mosaic_0001>

<llo_original>
// kernel: tpu_custom_call.1
$region0: #{tpu_custom_call.1}
  #allocation0 [shape = 'u32[]', space=smem, size = 0x4, offset = 0x4, fixed_abs, tag = 'smem constant byte address 0x4 - core index']
  #allocation1 [shape = 'u32[144,128]{1,0:T(1,128)}', space=vmem, size = 0x12000, scoped, tag = 'internal scratch']
  %s0 = inlined_call_operand.hbm [shape: f32[2,16,256], index: 0, kind: input, shape index: {}]
  %s1 = inlined_call_operand.vmem [shape: f32[2,16], index: 1, kind: input, shape index: {}]
  %s2 = inlined_call_operand.vmem [shape: f32[2,1], index: 2, kind: input, shape index: {}]
  %s3 = inlined_call_operand.vmem [shape: f32[16,2], index: 3, kind: input, shape index: {}]
  %s4 = inlined_call_operand.hbm [shape: f32[2,16,256], index: 4, kind: output, shape index: {}]
  %s5 = sld [smem:[#allocation0]]
  $region53: #{tpu_custom_call.1} parent=0
    _
  %s7 = ssub.s32 1, %s5
  %s8 = scalar_select 0, %s7, %s5
  $region1: #{tpu_custom_call.1} parent=0
    #allocation2 [shape = 'u8[32768]{0}', space=vmem, size = 0x8000, scoped, tag = 'input window, operand 0']
    #allocation3 [shape = 's32[2]{0}', space=sflag, size = 0x8, scoped, tag = 'scoped memory for tpu_custom_call.1']
    #allocation4 [shape = 's32[2]{0}', space=sflag, size = 0x8, scoped, tag = 'scoped memory for tpu_custom_call.1']
    #allocation5 [shape = 'u8[32768]{0}', space=vmem, size = 0x8000, scoped, tag = 'output window, operand 0']
    %9 = vsyncpa [#allocation3], 0
    %s10 = scalar_lea.sflag [#allocation3], 1
    %11 = vsyncpa %s10, 0
    %12 = vsyncpa [#allocation4], 0
    %s13 = scalar_lea.sflag [#allocation4], 1
    %14 = vsyncpa %s13, 0
    loop: start=0, step=1, limit=4
    $region2: #{tpu_custom_call.1} parent=1 // loop_pre_header
      _
    $region3: #{tpu_custom_call.1} parent=1 // loop_header
      %s16 = sphi 0, %s20
      %p17 = scmp.ge.s32.totalorder %s16, 4
      %s26 = sphi 0, %s28
      %s29 = sphi 0, %s26
      %s30 = sphi 0, %s29
      %s46 = sphi 0, %s30
      %s50 = sphi 0, %s50
      %s52 = sphi 0, %s50
      %s53 = sphi 0, %s52
      %s67 = sphi 0, %s53
      %s71 = sphi 0, %s71
      %s73 = sphi 0, %s71
      %s74 = sphi 0, %s73
      %s88 = sphi 0, %s74
      %s92 = sphi 0, %s92
      %s94 = sphi 0, %s92
      %s95 = sphi 0, %s94
      %s109 = sphi 0, %s95
      %s115 = sphi 0, %s117
      %s118 = sphi 0, %s115
      %s119 = sphi 0, %s118
      %s135 = sphi 0, %s119
    $region4: #{tpu_custom_call.1} parent=1 // loop_header_branch
      %19 = sbr.rel (%p17) target = $region8
    $region5: #{tpu_custom_call.1} parent=1 // loop_body
      %s21 = ssub.s32 %s16, 1
      %s22 = ssub.s32 %s16, 2
      %s23 = sadd.s32 %s16, 1
      %s24 = ssub.s32 %s16, %s23
      %p25 = scmp.eq.s32.totalorder %s24, 0
      %s27 = sadd.s32 %s26, 1
      %s28 = scalar_select %p25, %s26, %s27
      %p31 = pneg %p25
      %p32 = scmp.eq.s32.totalorder %s16, 1
      %p33 = por %p31, %p32
      %p34 = scmp.ne.s32.totalorder %s26, %s29
      %p35 = scmp.eq.s32.totalorder %s16, 0
      %p36 = por %p34, %p35
      %p37 = scmp.ne.s32.totalorder %s26, %s29
      %p38 = scmp.eq.s32.totalorder %s21, 1
      %p39 = por %p37, %p38
      %p40 = scmp.ne.s32.totalorder %s29, %s30
      %p41 = scmp.eq.s32.totalorder %s21, 0
      %p42 = por %p40, %p41
      %p43 = scmp.ne.s32.totalorder %s29, %s30
      %p44 = scmp.eq.s32.totalorder %s22, 1
      %p45 = por %p43, %p44
      %p47 = scmp.ne.s32.totalorder %s30, %s46
      %p48 = scmp.eq.s32.totalorder %s22, 0
      %p49 = por %p47, %p48
      %s51 = sadd.s32 %s50, 1
      %p54 = scmp.eq.s32.totalorder %s16, 1
      %p55 = scmp.ne.s32.totalorder %s50, %s52
      %p56 = scmp.eq.s32.totalorder %s16, 0
      %p57 = por %p55, %p56
      %p58 = scmp.ne.s32.totalorder %s50, %s52
      %p59 = scmp.eq.s32.totalorder %s21, 1
      %p60 = por %p58, %p59
      %p61 = scmp.ne.s32.totalorder %s52, %s53
      %p62 = scmp.eq.s32.totalorder %s21, 0
      %p63 = por %p61, %p62
      %p64 = scmp.ne.s32.totalorder %s52, %s53
      %p65 = scmp.eq.s32.totalorder %s22, 1
      %p66 = por %p64, %p65
      %p68 = scmp.ne.s32.totalorder %s53, %s67
      %p69 = scmp.eq.s32.totalorder %s22, 0
      %p70 = por %p68, %p69
      %s72 = sadd.s32 %s71, 1
      %p75 = scmp.eq.s32.totalorder %s16, 1
      %p76 = scmp.ne.s32.totalorder %s71, %s73
      %p77 = scmp.eq.s32.totalorder %s16, 0
      %p78 = por %p76, %p77
      %p79 = scmp.ne.s32.totalorder %s71, %s73
      %p80 = scmp.eq.s32.totalorder %s21, 1
      %p81 = por %p79, %p80
      %p82 = scmp.ne.s32.totalorder %s73, %s74
      %p83 = scmp.eq.s32.totalorder %s21, 0
      %p84 = por %p82, %p83
      %p85 = scmp.ne.s32.totalorder %s73, %s74
      %p86 = scmp.eq.s32.totalorder %s22, 1
      %p87 = por %p85, %p86
      %p89 = scmp.ne.s32.totalorder %s74, %s88
      %p90 = scmp.eq.s32.totalorder %s22, 0
      %p91 = por %p89, %p90
      %s93 = sadd.s32 %s92, 1
      %p96 = scmp.eq.s32.totalorder %s16, 1
      %p97 = scmp.ne.s32.totalorder %s92, %s94
      %p98 = scmp.eq.s32.totalorder %s16, 0
      %p99 = por %p97, %p98
      %p100 = scmp.ne.s32.totalorder %s92, %s94
      %p101 = scmp.eq.s32.totalorder %s21, 1
      %p102 = por %p100, %p101
      %p103 = scmp.ne.s32.totalorder %s94, %s95
      %p104 = scmp.eq.s32.totalorder %s21, 0
      %p105 = por %p103, %p104
      %p106 = scmp.ne.s32.totalorder %s94, %s95
      %p107 = scmp.eq.s32.totalorder %s22, 1
      %p108 = por %p106, %p107
      %p110 = scmp.ne.s32.totalorder %s95, %s109
      %p111 = scmp.eq.s32.totalorder %s22, 0
      %p112 = por %p110, %p111
      %s113 = ssub.s32 %s16, %s23
      %p114 = scmp.eq.s32.totalorder %s113, 0
      %s116 = sadd.s32 %s115, 1
      %s117 = scalar_select %p114, %s115, %s116
      %p120 = pneg %p114
      %p121 = scmp.eq.s32.totalorder %s16, 1
      %p122 = por %p120, %p121
      %p123 = scmp.ne.s32.totalorder %s115, %s118
      %p124 = scmp.eq.s32.totalorder %s16, 0
      %p125 = por %p123, %p124
      %p126 = scmp.ne.s32.totalorder %s115, %s118
      %p127 = scmp.eq.s32.totalorder %s21, 1
      %p128 = por %p126, %p127
      %p129 = scmp.ne.s32.totalorder %s118, %s119
      %p130 = scmp.eq.s32.totalorder %s21, 0
      %p131 = por %p129, %p130
      %p132 = scmp.ne.s32.totalorder %s118, %s119
      %p133 = scmp.eq.s32.totalorder %s22, 1
      %p134 = por %p132, %p133
      %p136 = scmp.ne.s32.totalorder %s119, %s135
      %p137 = scmp.eq.s32.totalorder %s22, 0
      %p138 = por %p136, %p137
      %p139 = scmp.le.s32.totalorder 1, %s16
      %p140 = scmp.lt.s32.totalorder %s16, 3
      %p141 = pnand %p139, %p140
      %p142 = pneg %p141
      // Predicated region
      $region9: #{tpu_custom_call.1} parent=5 // pred_check
        _
      $region10: #{tpu_custom_call.1} parent=5 // pred_check_branch
        %144 = sbr.rel (%p141) target = $region12
      $region11: #{tpu_custom_call.1} parent=5 // pred_region
        %s145 = ssub.s32 %s16, 1
        // Predicated region
        $region13: #{tpu_custom_call.1} parent=11 // pred_check
          %p146 = pneg %p63
        $region14: #{tpu_custom_call.1} parent=11 // pred_check_branch
          %148 = sbr.rel (%p146) target = $region16
        $region15: #{tpu_custom_call.1} parent=11 // pred_region
          _
        $region16: #{tpu_custom_call.1} parent=11 // pred_fallthru
          _
        // Predicated region
        $region17: #{tpu_custom_call.1} parent=11 // pred_check
          %p149 = pneg %p84
        $region18: #{tpu_custom_call.1} parent=11 // pred_check_branch
          %151 = sbr.rel (%p149) target = $region20
        $region19: #{tpu_custom_call.1} parent=11 // pred_region
          _
        $region20: #{tpu_custom_call.1} parent=11 // pred_fallthru
          _
        // Predicated region
        $region21: #{tpu_custom_call.1} parent=11 // pred_check
          %p152 = pneg %p105
        $region22: #{tpu_custom_call.1} parent=11 // pred_check_branch
          %154 = sbr.rel (%p152) target = $region24
        $region23: #{tpu_custom_call.1} parent=11 // pred_region
          _
        $region24: #{tpu_custom_call.1} parent=11 // pred_fallthru
          _
      $region12: #{tpu_custom_call.1} parent=5 // pred_fallthru
        _
      %p155 = scmp.lt.s32.totalorder %s16, 2
      // Predicated region
      $region25: #{tpu_custom_call.1} parent=5 // pred_check
        %p156 = pneg %p155
      $region26: #{tpu_custom_call.1} parent=5 // pred_check_branch
        %158 = sbr.rel (%p156) target = $region28
      $region27: #{tpu_custom_call.1} parent=5 // pred_region
        // Predicated region
        $region29: #{tpu_custom_call.1} parent=27 // pred_check
          %p159 = pneg %p36
        $region30: #{tpu_custom_call.1} parent=27 // pred_check_branch
          %161 = sbr.rel (%p159) target = $region32
        $region31: #{tpu_custom_call.1} parent=27 // pred_region
          %s162 = sand.u32 %s26, 1
          %s163 = scalar_lea.sflag [#allocation3], %s162
          %s164 = sand.u32 %s26, 1
          %s165 = smul.addr %s164, 32
          %s166 = scalar_lea.vmem [#allocation2], %s165
          %s168 = ssub.s32 512, 512
          %169 = vsyncadd %s163, %s168
          %s170 = smul.addr %s16, 4
          %s171 = smul.addr %s170, 128
          %s172 = scalar_lea.hbm %s0, %s171
          %s173 = sshll.u32 %s166, 4
          %s174 = int_to_ptr.vmem [resolvable:$true] %s173
          %179 = dma.hbm_to_vmem [thread:$0]  %s172, 512, %s174, %s163, 256, 256, 16
        $region32: #{tpu_custom_call.1} parent=27 // pred_fallthru
          _
      $region28: #{tpu_custom_call.1} parent=5 // pred_fallthru
        _
      %p180 = scmp.le.s32.totalorder 1, %s16
      %p181 = scmp.lt.s32.totalorder %s16, 3
      %p182 = pnand %p180, %p181
      %p183 = pneg %p182
      // Predicated region
      $region33: #{tpu_custom_call.1} parent=5 // pred_check
        _
      $region34: #{tpu_custom_call.1} parent=5 // pred_check_branch
        %185 = sbr.rel (%p182) target = $region36
      $region35: #{tpu_custom_call.1} parent=5 // pred_region
        %s186 = ssub.s32 %s16, 1
        %s187 = sand.u32 %s29, 1
        %s188 = scalar_lea.sflag [#allocation3], %s187
        %s189 = sand.u32 %s29, 1
        %s190 = smul.addr %s189, 32
        %s191 = scalar_lea.vmem [#allocation2], %s190
        // Predicated region
        $region37: #{tpu_custom_call.1} parent=35 // pred_check
          %p192 = pneg %p42
        $region38: #{tpu_custom_call.1} parent=35 // pred_check_branch
          %194 = sbr.rel (%p192) target = $region40
        $region39: #{tpu_custom_call.1} parent=35 // pred_region
          %195 = dma.done %s188, 512
        $region40: #{tpu_custom_call.1} parent=35 // pred_fallthru
          _
        %s196 = sand.u32 %s29, 1
        %s197 = scalar_lea.sflag [#allocation3], %s196
        %s198 = sand.u32 %s29, 1
        %s199 = smul.addr %s198, 32
        %s200 = scalar_lea.vmem [#allocation2], %s199
        %p201 = pneg %p42
        %p202 = pneg %p39
        %p203 = pneg %p63
        %p204 = pneg %p60
        %p205 = pneg %p84
        %p206 = pneg %p81
        %p207 = pneg %p105
        %p208 = pneg %p102
        %p209 = pneg %p131
        %p210 = pneg %p128
        %s211 = sand.u32 %s118, 1
        %s212 = scalar_lea.sflag [#allocation4], %s211
        %s213 = sand.u32 %s118, 1
        %s214 = smul.addr %s213, 32
        %s215 = scalar_lea.vmem [#allocation5], %s214
        %v216 = vld [vmem:[%s191] sm:$0xff]
        %v217 = vld [vmem:[%s191 + $0x8] sm:$0xff]
        %v218 = vld [vmem:[%s191 + $0x10] sm:$0xff]
        %v219 = vld [vmem:[%s191 + $0x18] sm:$0xff]
        %vm220 = vcmask 130048
        %v221 = vsel %vm220, %v216, 0.0
        %222 = vadd.xlane.f32.xlu0 %v221
        %v223 = vpop.xlane.xlu0 %222
        %v224 = vsel %vm220, %v218, 0.0
        %225 = vadd.xlane.f32.xlu0 %v224
        %v226 = vpop.xlane.xlu0 %225
        %229 = vrot.lane.b32.xlu0 %v216, 112
        %v230 = vpop.permute.xlu0 %229
        %231 = vrot.lane.b32.xlu0 %v218, 112
        %v232 = vpop.permute.xlu0 %231
        %v235 = vmax.f32 %v216, %v230
        %v236 = vmax.f32 %v218, %v232
        %v237 = vsel %vm220, %v230, 0.0
        %238 = vadd.xlane.f32.xlu0 %v237
        %v239 = vpop.xlane.xlu0 %238
        %v240 = vsel %vm220, %v232, 0.0
        %241 = vadd.xlane.f32.xlu0 %v240
        %v242 = vpop.xlane.xlu0 %241
        %243 = vrot.lane.b32.xlu0 %v216, 96
        %v244 = vpop.permute.xlu0 %243
        %245 = vrot.lane.b32.xlu0 %v218, 96
        %v246 = vpop.permute.xlu0 %245
        %v249 = vmax.f32 %v235, %v244
        %v250 = vmax.f32 %v236, %v246
        %v251 = vsel %vm220, %v244, 0.0
        %252 = vadd.xlane.f32.xlu0 %v251
        %v253 = vpop.xlane.xlu0 %252
        %v254 = vsel %vm220, %v246, 0.0
        %255 = vadd.xlane.f32.xlu0 %v254
        %v256 = vpop.xlane.xlu0 %255
        %257 = vrot.lane.b32.xlu0 %v216, 80
        %v258 = vpop.permute.xlu0 %257
        %259 = vrot.lane.b32.xlu0 %v218, 80
        %v260 = vpop.permute.xlu0 %259
        %v263 = vmax.f32 %v249, %v258
        %v264 = vmax.f32 %v250, %v260
        %v265 = vsel %vm220, %v258, 0.0
        %266 = vadd.xlane.f32.xlu0 %v265
        %v267 = vpop.xlane.xlu0 %266
        %v268 = vsel %vm220, %v260, 0.0
        %269 = vadd.xlane.f32.xlu0 %v268
        %v270 = vpop.xlane.xlu0 %269
        %271 = vrot.lane.b32.xlu0 %v216, 64
        %v272 = vpop.permute.xlu0 %271
        %273 = vrot.lane.b32.xlu0 %v218, 64
        %v274 = vpop.permute.xlu0 %273
        %v277 = vmax.f32 %v263, %v272
        %v278 = vmax.f32 %v264, %v274
        %v279 = vsel %vm220, %v272, 0.0
        %280 = vadd.xlane.f32.xlu0 %v279
        %v281 = vpop.xlane.xlu0 %280
        %v282 = vsel %vm220, %v274, 0.0
        %283 = vadd.xlane.f32.xlu0 %v282
        %v284 = vpop.xlane.xlu0 %283
        %285 = vrot.lane.b32.xlu0 %v216, 48
        %v286 = vpop.permute.xlu0 %285
        %287 = vrot.lane.b32.xlu0 %v218, 48
        %v288 = vpop.permute.xlu0 %287
        %v291 = vmax.f32 %v277, %v286
        %v292 = vmax.f32 %v278, %v288
        %v293 = vsel %vm220, %v286, 0.0
        %294 = vadd.xlane.f32.xlu0 %v293
        %v295 = vpop.xlane.xlu0 %294
        %v296 = vsel %vm220, %v288, 0.0
        %297 = vadd.xlane.f32.xlu0 %v296
        %v298 = vpop.xlane.xlu0 %297
        %299 = vrot.lane.b32.xlu0 %v216, 32
        %v300 = vpop.permute.xlu0 %299
        %301 = vrot.lane.b32.xlu0 %v218, 32
        %v302 = vpop.permute.xlu0 %301
        %v305 = vmax.f32 %v291, %v300
        %v306 = vmax.f32 %v292, %v302
        %v307 = vsel %vm220, %v300, 0.0
        %308 = vadd.xlane.f32.xlu0 %v307
        %v309 = vpop.xlane.xlu0 %308
        %v310 = vsel %vm220, %v302, 0.0
        %311 = vadd.xlane.f32.xlu0 %v310
        %v312 = vpop.xlane.xlu0 %311
        %313 = vrot.lane.b32.xlu0 %v216, 16
        %v314 = vpop.permute.xlu0 %313
        %315 = vrot.lane.b32.xlu0 %v218, 16
        %v316 = vpop.permute.xlu0 %315
        %v319 = vmax.f32 %v305, %v314
        %v320 = vmax.f32 %v306, %v316
        %v321 = vsel %vm220, %v314, 0.0
        %322 = vadd.xlane.f32.xlu0 %v321
        %v323 = vpop.xlane.xlu0 %322
        %v324 = vsel %vm220, %v316, 0.0
        %325 = vadd.xlane.f32.xlu0 %v324
        %v326 = vpop.xlane.xlu0 %325
        %v327 = vmax.f32 %v319, %v217
        %v328 = vmax.f32 %v320, %v219
        %v329 = vsel %vm220, %v217, 0.0
        %330 = vadd.xlane.f32.xlu0 %v329
        %v331 = vpop.xlane.xlu0 %330
        %v332 = vsel %vm220, %v219, 0.0
        %333 = vadd.xlane.f32.xlu0 %v332
        %v334 = vpop.xlane.xlu0 %333
        %337 = vrot.lane.b32.xlu0 %v217, 112
        %v338 = vpop.permute.xlu0 %337
        %339 = vrot.lane.b32.xlu0 %v219, 112
        %v340 = vpop.permute.xlu0 %339
        %v343 = vmax.f32 %v327, %v338
        %v344 = vmax.f32 %v328, %v340
        %v345 = vsel %vm220, %v338, 0.0
        %346 = vadd.xlane.f32.xlu0 %v345
        %v347 = vpop.xlane.xlu0 %346
        %v348 = vsel %vm220, %v340, 0.0
        %349 = vadd.xlane.f32.xlu0 %v348
        %v350 = vpop.xlane.xlu0 %349
        %351 = vrot.lane.b32.xlu0 %v217, 96
        %v352 = vpop.permute.xlu0 %351
        %353 = vrot.lane.b32.xlu0 %v219, 96
        %v354 = vpop.permute.xlu0 %353
        %v357 = vmax.f32 %v343, %v352
        %v358 = vmax.f32 %v344, %v354
        %v359 = vsel %vm220, %v352, 0.0
        %360 = vadd.xlane.f32.xlu0 %v359
        %v361 = vpop.xlane.xlu0 %360
        %v362 = vsel %vm220, %v354, 0.0
        %363 = vadd.xlane.f32.xlu0 %v362
        %v364 = vpop.xlane.xlu0 %363
        %365 = vrot.lane.b32.xlu0 %v217, 80
        %v366 = vpop.permute.xlu0 %365
        %367 = vrot.lane.b32.xlu0 %v219, 80
        %v368 = vpop.permute.xlu0 %367
        %v371 = vmax.f32 %v357, %v366
        %v372 = vmax.f32 %v358, %v368
        %v373 = vsel %vm220, %v366, 0.0
        %374 = vadd.xlane.f32.xlu0 %v373
        %v375 = vpop.xlane.xlu0 %374
        %v376 = vsel %vm220, %v368, 0.0
        %377 = vadd.xlane.f32.xlu0 %v376
        %v378 = vpop.xlane.xlu0 %377
        %379 = vrot.lane.b32.xlu0 %v217, 64
        %v380 = vpop.permute.xlu0 %379
        %381 = vrot.lane.b32.xlu0 %v219, 64
        %v382 = vpop.permute.xlu0 %381
        %v385 = vmax.f32 %v371, %v380
        %v386 = vmax.f32 %v372, %v382
        %v387 = vsel %vm220, %v380, 0.0
        %388 = vadd.xlane.f32.xlu0 %v387
        %v389 = vpop.xlane.xlu0 %388
        %v390 = vsel %vm220, %v382, 0.0
        %391 = vadd.xlane.f32.xlu0 %v390
        %v392 = vpop.xlane.xlu0 %391
        %393 = vrot.lane.b32.xlu0 %v217, 48
        %v394 = vpop.permute.xlu0 %393
        %395 = vrot.lane.b32.xlu0 %v219, 48
        %v396 = vpop.permute.xlu0 %395
        %v399 = vmax.f32 %v385, %v394
        %v400 = vmax.f32 %v386, %v396
        %v401 = vsel %vm220, %v394, 0.0
        %402 = vadd.xlane.f32.xlu0 %v401
        %v403 = vpop.xlane.xlu0 %402
        %v404 = vsel %vm220, %v396, 0.0
        %405 = vadd.xlane.f32.xlu0 %v404
        %v406 = vpop.xlane.xlu0 %405
        %407 = vrot.lane.b32.xlu0 %v217, 32
        %v408 = vpop.permute.xlu0 %407
        %409 = vrot.lane.b32.xlu0 %v219, 32
        %v410 = vpop.permute.xlu0 %409
        %v413 = vmax.f32 %v399, %v408
        %v414 = vmax.f32 %v400, %v410
        %v415 = vsel %vm220, %v408, 0.0
        %416 = vadd.xlane.f32.xlu0 %v415
        %v417 = vpop.xlane.xlu0 %416
        %v418 = vsel %vm220, %v410, 0.0
        %419 = vadd.xlane.f32.xlu0 %v418
        %v420 = vpop.xlane.xlu0 %419
        %421 = vrot.lane.b32.xlu0 %v217, 16
        %v422 = vpop.permute.xlu0 %421
        %423 = vrot.lane.b32.xlu0 %v219, 16
        %v424 = vpop.permute.xlu0 %423
        %v427 = vmax.f32 %v413, %v422
        %v428 = vmax.f32 %v414, %v424
        %v429 = vsel %vm220, %v422, 0.0
        %430 = vadd.xlane.f32.xlu0 %v429
        %v431 = vpop.xlane.xlu0 %430
        %v432 = vsel %vm220, %v424, 0.0
        %433 = vadd.xlane.f32.xlu0 %v432
        %v434 = vpop.xlane.xlu0 %433
        %vm435 = vcmask 7168
        %v436 = vsel %vm435, %v223, %v239
        %v437 = vsel %vm435, %v226, %v242
        %vm438 = vcmask 15360
        %v439 = vsel %vm438, %v436, %v253
        %v440 = vsel %vm438, %v437, %v256
        %vm441 = vcmask 23552
        %v442 = vsel %vm441, %v439, %v267
        %v443 = vsel %vm441, %v440, %v270
        %vm444 = vcmask 31744
        %v445 = vsel %vm444, %v442, %v281
        %v446 = vsel %vm444, %v443, %v284
        %vm447 = vcmask 39936
        %v448 = vsel %vm447, %v445, %v295
        %v449 = vsel %vm447, %v446, %v298
        %vm450 = vcmask 48128
        %v451 = vsel %vm450, %v448, %v309
        %v452 = vsel %vm450, %v449, %v312
        %vm453 = vcmask 56320
        %v454 = vsel %vm453, %v451, %v323
        %v455 = vsel %vm453, %v452, %v326
        %vm456 = vcmask 64512
        %v457 = vsel %vm456, %v454, %v331
        %v458 = vsel %vm456, %v455, %v334
        %vm459 = vcmask 72704
        %v460 = vsel %vm459, %v457, %v347
        %v461 = vsel %vm459, %v458, %v350
        %vm462 = vcmask 80896
        %v463 = vsel %vm462, %v460, %v361
        %v464 = vsel %vm462, %v461, %v364
        %vm465 = vcmask 89088
        %v466 = vsel %vm465, %v463, %v375
        %v467 = vsel %vm465, %v464, %v378
        %vm468 = vcmask 97280
        %v469 = vsel %vm468, %v466, %v389
        %v470 = vsel %vm468, %v467, %v392
        %vm471 = vcmask 105472
        %v472 = vsel %vm471, %v469, %v403
        %v473 = vsel %vm471, %v470, %v406
        %vm474 = vcmask 113664
        %v475 = vsel %vm474, %v472, %v417
        %v476 = vsel %vm474, %v473, %v420
        %vm477 = vcmask 121856
        %v478 = vsel %vm477, %v475, %v431
        %v479 = vsel %vm477, %v476, %v434
        %v480 = vmul.f32 %v478, 0.0625
        %v481 = vmul.f32 %v479, 0.0625
        %484 = vrot.lane.b32.xlu0 %v427, 16
        %v485 = vpop.permute.xlu0 %484
        %486 = vrot.lane.b32.xlu0 %v428, 16
        %v487 = vpop.permute.xlu0 %486
        %v490 = vsel %vm220, %v480, %v485
        %v491 = vsel %vm220, %v481, %v487
        %v492 = vld [vmem:[%s1] sm:$0x3]
        %v493 = vld [vmem:[%s2] sm:$0x3]
        %495 = vset.pattern.permute.xlu0 0
        %496 = vperm.xlu0 %495, %v493
        %v497 = vpop.permute.xlu0 %496
        %v500 = vsel %vm220, %v492, 0
        %502 = vmatprep.subr.mxu0 0.0
        %503 = vmatpush1.msra.mxu0 0.0
        %504 = vmatprep.subr.mxu0 0.0
        %505 = vmatpush1.msra.mxu0 0.0
        %506 = vmatprep.subr.mxu0 0.0
        %507 = vmatpush1.msra.mxu0 0.0
        %508 = vmatprep.subr.mxu0 0.0
        %509 = vmatpush1.msra.mxu0 0.0
        %510 = vmatprep.subr.mxu0 0.0
        %511 = vmatpush1.msra.mxu0 0.0
        %512 = vmatprep.subr.mxu0 0.0
        %513 = vmatpush1.msra.mxu0 0.0
        %514 = vmatprep.subr.mxu0 0.0
        %515 = vmatpush1.msra.mxu0 0.0
        %516 = vmatprep.subr.mxu0 0.0
        %517 = vmatpush1.msra.mxu0 0.0
        %518 = vmatprep.subr.mxu0 0.0
        %519 = vmatpush1.msra.mxu0 0.0
        %520 = vmatprep.subr.mxu0 0.0
        %521 = vmatpush1.msra.mxu0 0.0
        %522 = vmatprep.subr.mxu0 0.0
        %523 = vmatpush1.msra.mxu0 0.0
        %524 = vmatprep.subr.mxu0 0.0
        %525 = vmatpush1.msra.mxu0 0.0
        %526 = vmatprep.subr.mxu0 0.0
        %527 = vmatpush1.msra.mxu0 0.0
        %528 = vmatprep.subr.mxu0 0.0
        %529 = vmatpush1.msra.mxu0 0.0
        %530 = vmatprep.subr.mxu0 0.0
        %531 = vmatpush1.msra.mxu0 %v491
        %532 = vmatprep.subr.mxu0 0.0
        %533 = vmatpush1.msra.mxu0 %v490
        %534 = vmatprep.subr.mxu0 0.0
        %535 = vmatpush2.msra.mxu0 0.0
        %536 = vmatprep.subr.mxu0 0.0
        %537 = vmatpush2.msra.mxu0 0.0
        %538 = vmatprep.subr.mxu0 0.0
        %539 = vmatpush2.msra.mxu0 0.0
        %540 = vmatprep.subr.mxu0 0.0
        %541 = vmatpush2.msra.mxu0 0.0
        %542 = vmatprep.subr.mxu0 0.0
        %543 = vmatpush2.msra.mxu0 0.0
        %544 = vmatprep.subr.mxu0 0.0
        %545 = vmatpush2.msra.mxu0 0.0
        %546 = vmatprep.subr.mxu0 0.0
        %547 = vmatpush2.msra.mxu0 0.0
        %548 = vmatprep.subr.mxu0 0.0
        %549 = vmatpush2.msra.mxu0 0.0
        %550 = vmatprep.subr.mxu0 0.0
        %551 = vmatpush2.msra.mxu0 0.0
        %552 = vmatprep.subr.mxu0 0.0
        %553 = vmatpush2.msra.mxu0 0.0
        %554 = vmatprep.subr.mxu0 0.0
        %555 = vmatpush2.msra.mxu0 0.0
        %556 = vmatprep.subr.mxu0 0.0
        %557 = vmatpush2.msra.mxu0 0.0
        %558 = vmatprep.subr.mxu0 0.0
        %559 = vmatpush2.msra.mxu0 0.0
        %560 = vmatprep.subr.mxu0 0.0
        %561 = vmatpush2.msra.mxu0 0.0
        %562 = vmatprep.subr.mxu0 0.0
        %563 = vmatpush2.msra.mxu0 0.0
        %564 = vmatprep.subr.mxu0 0.0
        %565 = vmatpush2.msra.mxu0 0.0
        %566 = vmatprep.mubr.f32.mxu0 0.0
        %567 = vmatmul.mubr.f32.gmra.mxu0 %v500
        %v568 = vpop.f32.mrf.mxu0
        %v569 = vadd.f32 %v497, %v568
        %v570 = vpop.f32.mrf.mxu0
        %571 = vdwg.mxu0
        %v572 = vadd.f32 %v569, 3.0
        %v573 = vmax.f32 %v572, 0.0
        %v574 = vmin.f32 %v573, 6.0
        %v575 = vmul.f32 %v574, 0.16666667
        %v576 = vmul.f32 %v569, %v575
        %v577 = vld [vmem:[%s3] sm:$0xff]
        %v578 = vld [vmem:[%s3 + $0x8] sm:$0xff]
        %v580 = vsel %vm438, %v577, 0
        %v583 = vsel %vm438, %v578, 0
        %vm585 = vcmask 1041408
        %v587 = vsel %vm585, %v576, 0
        %589 = vmatprep.subr.mxu0 0.0
        %590 = vmatpush1.msra.mxu0 0.0
        %591 = vmatprep.subr.mxu0 0.0
        %592 = vmatpush1.msra.mxu0 0.0
        %593 = vmatprep.subr.mxu0 0.0
        %594 = vmatpush1.msra.mxu0 0.0
        %595 = vmatprep.subr.mxu0 0.0
        %596 = vmatpush1.msra.mxu0 0.0
        %597 = vmatprep.subr.mxu0 0.0
        %598 = vmatpush1.msra.mxu0 0.0
        %599 = vmatprep.subr.mxu0 0.0
        %600 = vmatpush1.msra.mxu0 0.0
        %601 = vmatprep.subr.mxu0 0.0
        %602 = vmatpush1.msra.mxu0 0.0
        %603 = vmatprep.subr.mxu0 0.0
        %604 = vmatpush1.msra.mxu0 0.0
        %605 = vmatprep.subr.mxu0 0.0
        %606 = vmatpush1.msra.mxu0 0.0
        %607 = vmatprep.subr.mxu0 0.0
        %608 = vmatpush1.msra.mxu0 0.0
        %609 = vmatprep.subr.mxu0 0.0
        %610 = vmatpush1.msra.mxu0 0.0
        %611 = vmatprep.subr.mxu0 0.0
        %612 = vmatpush1.msra.mxu0 0.0
        %613 = vmatprep.subr.mxu0 0.0
        %614 = vmatpush1.msra.mxu0 0.0
        %615 = vmatprep.subr.mxu0 0.0
        %616 = vmatpush1.msra.mxu0 0.0
        %617 = vmatprep.subr.mxu0 0.0
        %618 = vmatpush1.msra.mxu0 0.0
        %619 = vmatprep.subr.mxu0 0.0
        %620 = vmatpush1.msra.mxu0 %v587
        %621 = vmatprep.subr.mxu0 0.0
        %622 = vmatpush2.msra.mxu0 0.0
        %623 = vmatprep.subr.mxu0 0.0
        %624 = vmatpush2.msra.mxu0 0.0
        %625 = vmatprep.subr.mxu0 0.0
        %626 = vmatpush2.msra.mxu0 0.0
        %627 = vmatprep.subr.mxu0 0.0
        %628 = vmatpush2.msra.mxu0 0.0
        %629 = vmatprep.subr.mxu0 0.0
        %630 = vmatpush2.msra.mxu0 0.0
        %631 = vmatprep.subr.mxu0 0.0
        %632 = vmatpush2.msra.mxu0 0.0
        %633 = vmatprep.subr.mxu0 0.0
        %634 = vmatpush2.msra.mxu0 0.0
        %635 = vmatprep.subr.mxu0 0.0
        %636 = vmatpush2.msra.mxu0 0.0
        %637 = vmatprep.subr.mxu0 0.0
        %638 = vmatpush2.msra.mxu0 0.0
        %639 = vmatprep.subr.mxu0 0.0
        %640 = vmatpush2.msra.mxu0 0.0
        %641 = vmatprep.subr.mxu0 0.0
        %642 = vmatpush2.msra.mxu0 0.0
        %643 = vmatprep.subr.mxu0 0.0
        %644 = vmatpush2.msra.mxu0 0.0
        %645 = vmatprep.subr.mxu0 0.0
        %646 = vmatpush2.msra.mxu0 0.0
        %647 = vmatprep.subr.mxu0 0.0
        %648 = vmatpush2.msra.mxu0 0.0
        %649 = vmatprep.subr.mxu0 0.0
        %650 = vmatpush2.msra.mxu0 0.0
        %651 = vmatprep.subr.mxu0 0.0
        %652 = vmatpush2.msra.mxu0 0.0
        %653 = vmatprep.mubr.f32.mxu0 0.0
        %654 = vmatmul.mubr.f32.gmra.mxu0 %v580
        %v655 = vpop.f32.mrf.mxu0
        %v656 = vadd.f32 0.0, %v655
        %v657 = vpop.f32.mrf.mxu0
        %658 = vmatprep.mubr.f32.mxu0 0.0
        %659 = vmatmul.mubr.f32.gmra.mxu0 %v583
        %v660 = vpop.f32.mrf.mxu0
        %v661 = vadd.f32 0.0, %v660
        %v662 = vpop.f32.mrf.mxu0
        %663 = vdwg.mxu0
        %v664 = vxor.u32 %v656, 2147483648
        %v665 = vxor.u32 %v661, 2147483648
        %v666 = vmul.f32 %v664, 1.442695
        %v667 = vpow.pop %v666
        %v668 = vmul.f32 %v665, 1.442695
        %v669 = vpow.pop %v668
        %v670 = vadd.f32 %v667, 1.0
        %v671 = vadd.f32 %v669, 1.0
        %v672 = vrcp.pop %v670
        %v673 = vmul.f32 1.0, %v672
        %v674 = vrcp.pop %v671
        %v675 = vmul.f32 1.0, %v674
        %678 = vrot.lane.b32.xlu0 %v673, 112
        %v679 = vpop.permute.xlu0 %678
        %680 = vrot.lane.b32.xlu0 %v675, 112
        %v681 = vpop.permute.xlu0 %680
        %684 = vrot.lane.b32.xlu0 %v673, 16
        %v685 = vpop.permute.xlu0 %684
        %686 = vrot.lane.b32.xlu0 %v675, 16
        %v687 = vpop.permute.xlu0 %686
        %690 = vrot.lane.b32.xlu0 %v673, 32
        %v691 = vpop.permute.xlu0 %690
        %692 = vrot.lane.b32.xlu0 %v675, 32
        %v693 = vpop.permute.xlu0 %692
        %696 = vrot.lane.b32.xlu0 %v673, 48
        %v697 = vpop.permute.xlu0 %696
        %698 = vrot.lane.b32.xlu0 %v675, 48
        %v699 = vpop.permute.xlu0 %698
        %702 = vrot.lane.b32.xlu0 %v673, 64
        %v703 = vpop.permute.xlu0 %702
        %704 = vrot.lane.b32.xlu0 %v675, 64
        %v705 = vpop.permute.xlu0 %704
        %708 = vrot.lane.b32.xlu0 %v673, 80
        %v709 = vpop.permute.xlu0 %708
        %710 = vrot.lane.b32.xlu0 %v675, 80
        %v711 = vpop.permute.xlu0 %710
        %714 = vrot.lane.b32.xlu0 %v673, 96
        %v715 = vpop.permute.xlu0 %714
        %716 = vrot.lane.b32.xlu0 %v675, 96
        %v717 = vpop.permute.xlu0 %716
        %v720 = vsel %vm220, %v679, %v673
        %v721 = vsel %vm220, %v681, %v675
        %vm722 = vcmask 261120
        %v723 = vsel %vm722, %v720, %v685
        %v724 = vsel %vm722, %v721, %v687
        %vm725 = vcmask 392192
        %v726 = vsel %vm725, %v723, %v691
        %v727 = vsel %vm725, %v724, %v693
        %vm728 = vcmask 523264
        %v729 = vsel %vm728, %v726, %v697
        %v730 = vsel %vm728, %v727, %v699
        %vm731 = vcmask 654336
        %v732 = vsel %vm731, %v729, %v703
        %v733 = vsel %vm731, %v730, %v705
        %vm734 = vcmask 785408
        %v735 = vsel %vm734, %v732, %v709
        %v736 = vsel %vm734, %v733, %v711
        %vm737 = vcmask 916480
        %v738 = vsel %vm737, %v735, %v715
        %v739 = vsel %vm737, %v736, %v717
        %740 = vset.pattern.permute.xlu0 0
        %741 = vperm.xlu0 %740, %v673
        %v742 = vpop.permute.xlu0 %741
        %744 = vset.pattern.permute.xlu0 0
        %745 = vperm.xlu0 %744, %v675
        %v746 = vpop.permute.xlu0 %745
        %748 = vset.pattern.permute.xlu0 1
        %749 = vperm.xlu0 %748, %v673
        %v750 = vpop.permute.xlu0 %749
        %752 = vset.pattern.permute.xlu0 1
        %753 = vperm.xlu0 %752, %v675
        %v754 = vpop.permute.xlu0 %753
        %756 = vset.pattern.permute.xlu0 2
        %757 = vperm.xlu0 %756, %v673
        %v758 = vpop.permute.xlu0 %757
        %760 = vset.pattern.permute.xlu0 2
        %761 = vperm.xlu0 %760, %v675
        %v762 = vpop.permute.xlu0 %761
        %764 = vset.pattern.permute.xlu0 3
        %765 = vperm.xlu0 %764, %v673
        %v766 = vpop.permute.xlu0 %765
        %768 = vset.pattern.permute.xlu0 3
        %769 = vperm.xlu0 %768, %v675
        %v770 = vpop.permute.xlu0 %769
        %772 = vset.pattern.permute.xlu0 4
        %773 = vperm.xlu0 %772, %v673
        %v774 = vpop.permute.xlu0 %773
        %776 = vset.pattern.permute.xlu0 4
        %777 = vperm.xlu0 %776, %v675
        %v778 = vpop.permute.xlu0 %777
        %780 = vset.pattern.permute.xlu0 5
        %781 = vperm.xlu0 %780, %v673
        %v782 = vpop.permute.xlu0 %781
        %784 = vset.pattern.permute.xlu0 5
        %785 = vperm.xlu0 %784, %v675
        %v786 = vpop.permute.xlu0 %785
        %788 = vset.pattern.permute.xlu0 6
        %789 = vperm.xlu0 %788, %v673
        %v790 = vpop.permute.xlu0 %789
        %792 = vset.pattern.permute.xlu0 6
        %793 = vperm.xlu0 %792, %v675
        %v794 = vpop.permute.xlu0 %793
        %796 = vset.pattern.permute.xlu0 7
        %797 = vperm.xlu0 %796, %v673
        %v798 = vpop.permute.xlu0 %797
        %800 = vset.pattern.permute.xlu0 7
        %801 = vperm.xlu0 %800, %v675
        %v802 = vpop.permute.xlu0 %801
        %804 = vset.pattern.permute.xlu0 8
        %805 = vperm.xlu0 %804, %v673
        %v806 = vpop.permute.xlu0 %805
        %808 = vset.pattern.permute.xlu0 8
        %809 = vperm.xlu0 %808, %v675
        %v810 = vpop.permute.xlu0 %809
        %812 = vset.pattern.permute.xlu0 9
        %813 = vperm.xlu0 %812, %v673
        %v814 = vpop.permute.xlu0 %813
        %816 = vset.pattern.permute.xlu0 9
        %817 = vperm.xlu0 %816, %v675
        %v818 = vpop.permute.xlu0 %817
        %820 = vset.pattern.permute.xlu0 10
        %821 = vperm.xlu0 %820, %v673
        %v822 = vpop.permute.xlu0 %821
        %824 = vset.pattern.permute.xlu0 10
        %825 = vperm.xlu0 %824, %v675
        %v826 = vpop.permute.xlu0 %825
        %828 = vset.pattern.permute.xlu0 11
        %829 = vperm.xlu0 %828, %v673
        %v830 = vpop.permute.xlu0 %829
        %832 = vset.pattern.permute.xlu0 11
        %833 = vperm.xlu0 %832, %v675
        %v834 = vpop.permute.xlu0 %833
        %836 = vset.pattern.permute.xlu0 12
        %837 = vperm.xlu0 %836, %v673
        %v838 = vpop.permute.xlu0 %837
        %840 = vset.pattern.permute.xlu0 12
        %841 = vperm.xlu0 %840, %v675
        %v842 = vpop.permute.xlu0 %841
        %844 = vset.pattern.permute.xlu0 13
        %845 = vperm.xlu0 %844, %v673
        %v846 = vpop.permute.xlu0 %845
        %848 = vset.pattern.permute.xlu0 13
        %849 = vperm.xlu0 %848, %v675
        %v850 = vpop.permute.xlu0 %849
        %852 = vset.pattern.permute.xlu0 14
        %853 = vperm.xlu0 %852, %v673
        %v854 = vpop.permute.xlu0 %853
        %856 = vset.pattern.permute.xlu0 14
        %857 = vperm.xlu0 %856, %v675
        %v858 = vpop.permute.xlu0 %857
        %860 = vset.pattern.permute.xlu0 15
        %861 = vperm.xlu0 %860, %v673
        %v862 = vpop.permute.xlu0 %861
        %864 = vset.pattern.permute.xlu0 15
        %865 = vperm.xlu0 %864, %v675
        %v866 = vpop.permute.xlu0 %865
        %v868 = vsel %vm220, %v742, %v750
        %v869 = vsel %vm220, %v746, %v754
        %v870 = vsel %vm722, %v868, %v758
        %v871 = vsel %vm722, %v869, %v762
        %v872 = vsel %vm725, %v870, %v766
        %v873 = vsel %vm725, %v871, %v770
        %v874 = vsel %vm728, %v872, %v774
        %v875 = vsel %vm728, %v873, %v778
        %v876 = vsel %vm731, %v874, %v782
        %v877 = vsel %vm731, %v875, %v786
        %v878 = vsel %vm734, %v876, %v790
        %v879 = vsel %vm734, %v877, %v794
        %v880 = vsel %vm737, %v878, %v798
        %v881 = vsel %vm737, %v879, %v802
        %v882 = vsel %vm220, %v806, %v814
        %v883 = vsel %vm220, %v810, %v818
        %v884 = vsel %vm722, %v882, %v822
        %v885 = vsel %vm722, %v883, %v826
        %v886 = vsel %vm725, %v884, %v830
        %v887 = vsel %vm725, %v885, %v834
        %v888 = vsel %vm728, %v886, %v838
        %v889 = vsel %vm728, %v887, %v842
        %v890 = vsel %vm731, %v888, %v846
        %v891 = vsel %vm731, %v889, %v850
        %v892 = vsel %vm734, %v890, %v854
        %v893 = vsel %vm734, %v891, %v858
        %v894 = vsel %vm737, %v892, %v862
        %v895 = vsel %vm737, %v893, %v866
        %v896 = vmul.f32 %v880, %v738
        %v897 = vmul.f32 %v894, %v738
        %v898 = vmul.f32 %v881, %v739
        %v899 = vmul.f32 %v895, %v739
        %900 = vst [vmem:[%s215] sm:$0xff] %v896
        %901 = vst [vmem:[%s215 + $0x8] sm:$0xff] %v897
        %902 = vst [vmem:[%s215 + $0x10] sm:$0xff] %v898
        %903 = vst [vmem:[%s215 + $0x18] sm:$0xff] %v899
        %s904 = sand.u32 %s118, 1
        %s905 = scalar_lea.sflag [#allocation4], %s904
        %s906 = sand.u32 %s118, 1
        %s907 = smul.addr %s906, 32
        %s908 = scalar_lea.vmem [#allocation5], %s907
        // Predicated region
        $region41: #{tpu_custom_call.1} parent=35 // pred_check
          %p909 = pneg %p128
        $region42: #{tpu_custom_call.1} parent=35 // pred_check_branch
          %911 = sbr.rel (%p909) target = $region44
        $region43: #{tpu_custom_call.1} parent=35 // pred_region
          %s913 = ssub.s32 512, 512
          %914 = vsyncadd %s905, %s913
          %s915 = smul.addr %s21, 4
          %s916 = smul.addr %s915, 128
          %s917 = scalar_lea.hbm %s4, %s916
          %s918 = sshll.u32 %s908, 4
          %s919 = int_to_ptr.vmem [resolvable:$true] %s918
          %924 = dma.vmem_to_hbm [thread:$0]  %s919, 512, %s917, %s905, 256, 256, 16
        $region44: #{tpu_custom_call.1} parent=35 // pred_fallthru
          _
      $region36: #{tpu_custom_call.1} parent=5 // pred_fallthru
        _
      %p925 = scmp.le.s32.totalorder 2, %s16
      // Predicated region
      $region45: #{tpu_custom_call.1} parent=5 // pred_check
        %p926 = pneg %p925
      $region46: #{tpu_custom_call.1} parent=5 // pred_check_branch
        %928 = sbr.rel (%p926) target = $region48
      $region47: #{tpu_custom_call.1} parent=5 // pred_region
        %s929 = ssub.s32 %s16, 2
        // Predicated region
        $region49: #{tpu_custom_call.1} parent=47 // pred_check
          %p930 = pneg %p134
        $region50: #{tpu_custom_call.1} parent=47 // pred_check_branch
          %932 = sbr.rel (%p930) target = $region52
        $region51: #{tpu_custom_call.1} parent=47 // pred_region
          %s933 = sand.u32 %s119, 1
          %s934 = scalar_lea.sflag [#allocation4], %s933
          %s935 = sand.u32 %s119, 1
          %s936 = smul.addr %s935, 32
          %s937 = scalar_lea.vmem [#allocation5], %s936
          %938 = dma.done %s934, 512
        $region52: #{tpu_custom_call.1} parent=47 // pred_fallthru
          _
      $region48: #{tpu_custom_call.1} parent=5 // pred_fallthru
        _
    $region6: #{tpu_custom_call.1} parent=1 // loop_footer
      %s20 = sadd.s32 1, %s16
    $region7: #{tpu_custom_call.1} parent=1 // loop_footer_branch
      %15 = sbr.rel target = $region3
    $region8: #{tpu_custom_call.1} parent=1 // loop_exit
      _
    %939 = vsyncpa [#allocation3], 1
    %s940 = scalar_lea.sflag [#allocation3], 1
    %941 = vsyncpa %s940, 1
    %942 = vsyncpa [#allocation4], 1
    %s943 = scalar_lea.sflag [#allocation4], 1
    %944 = vsyncpa %s943, 1

</llo_original>
